<compile_context>
chip_gen: v5e
topology: v5e:2x2
jax: 0.10.0
libtpu: 0.0.40
codegen_flags: <defaults>
</compile_context>

<pallas_src>
from collections import OrderedDict

import jax
import jax.numpy as jnp
from jax.experimental import pallas as pl
from jax.experimental.pallas import tpu as pltpu


def _round_up(x, m):
    return (x + m - 1) // m * m


# ----------------------------------------------------------------------------
# Pallas kernel: single-shot matmul with fused bias + ReLU (conv hot path).
# The whole K dim lives in one block (K = 9*Cin is small for every level), so
# there is no reduction grid axis and no accumulator scratch.
# ----------------------------------------------------------------------------
def _matmul_bias_relu_kernel(a_ref, b_ref, bias_ref, o_ref):
    acc = jnp.dot(a_ref[...], b_ref[...], preferred_element_type=jnp.float32)
    out = acc + bias_ref[...]                    # (1, tn) f32 broadcasts over rows
    o_ref[...] = jnp.maximum(out, 0.0).astype(o_ref.dtype)


def matmul_bias_relu(a, b, bias, *, tm=512, tn=128, out_dtype=jnp.bfloat16):
    """relu(a @ b + bias); a:(M,K) b:(K,N) bias:(N,) -> (M,N) out_dtype.

    a/b are cast to bfloat16 for the MXU; accumulation is float32.
    """
    M, K = a.shape
    K2, N = b.shape
    assert K == K2

    a = a.astype(jnp.bfloat16)
    b = b.astype(jnp.bfloat16)
    bias = bias.astype(jnp.float32).reshape(1, N)

    # Row (M) tiling: big tiles amortize per-step overhead; pad only if needed.
    tm = min(tm, _round_up(M, 8))
    Mp = _round_up(M, tm)
    if Mp != M:
        a = jnp.pad(a, ((0, Mp - M), (0, 0)))

    # Column (N) tiling: lane-dense 128-wide tiles when N allows, otherwise a
    # single full-dim block (allowed by the full-array-dim exception).
    tn = min(tn, N) if N % 128 == 0 else N
    Np = N

    grid = (Mp // tm, Np // tn)
    out = pl.pallas_call(
        _matmul_bias_relu_kernel,
        out_shape=jax.ShapeDtypeStruct((Mp, Np), out_dtype),
        grid_spec=pltpu.PrefetchScalarGridSpec(
            num_scalar_prefetch=0,
            grid=grid,
            in_specs=[
                pl.BlockSpec((tm, K), lambda i, j: (i, 0)),   # full-K block
                pl.BlockSpec((K, tn), lambda i, j: (0, j)),
                pl.BlockSpec((1, tn), lambda i, j: (0, j)),   # bias row
            ],
            out_specs=pl.BlockSpec((tm, tn), lambda i, j: (i, j)),
        ),
        compiler_params=pltpu.CompilerParams(
            dimension_semantics=("parallel", "parallel"),
        ),
    )(a, b, bias)
    if Mp != M:
        out = out[:M]
    return out


# ----------------------------------------------------------------------------
# Conv 3x3 stride 2 pad 1 (+bias, +ReLU) via im2col -> Pallas matmul (bf16).
# ----------------------------------------------------------------------------
def conv3x3_s2_relu(x_nhwc, w, bias):
    """x_nhwc:(N,H,W,Cin)  w:(3,3,Cin,Cout)  bias:(Cout,) -> (N,Ho,Wo,Cout)."""
    N, H, W, C = x_nhwc.shape
    ks, stride, pad = 3, 2, 1
    Ho = (H + 2 * pad - ks) // stride + 1
    Wo = (W + 2 * pad - ks) // stride + 1
    x = x_nhwc.astype(jnp.bfloat16)              # halve im2col HBM traffic
    xp = jnp.pad(x, ((0, 0), (pad, pad), (pad, pad), (0, 0)))
    # TODO(synk): fold the 9 taps into the kernel grid (element-offset
    # index_map over the padded NHWC input) to avoid materializing ~9x the
    # activation volume in HBM before the matmul.
    patches = [
        xp[:, dy:dy + stride * Ho:stride, dx:dx + stride * Wo:stride, :]
        for dy in range(ks) for dx in range(ks)
    ]
    cols = jnp.concatenate(patches, axis=-1).reshape(N * Ho * Wo, ks * ks * C)
    w_mat = w.reshape(ks * ks * C, -1)
    out = matmul_bias_relu(cols, w_mat, bias, out_dtype=jnp.bfloat16)
    return out.reshape(N, Ho, Wo, w.shape[-1])


# ----------------------------------------------------------------------------
# Simplified multi-level backbone (stand-in for ResNet34 / ConvNextTiny).
# ----------------------------------------------------------------------------
class SimpleConvBackbone:
    # TODO(synk): full ResNet34 / ConvNextTiny tower definitions are not part
    # of the given module; this is a simplified 3-level strided-conv feature
    # pyramid, with every conv's hot path in the Pallas kernel above.
    def __init__(self, input_dim=3, widths=(8, 16, 32), key=None):
        key = jax.random.PRNGKey(0) if key is None else key
        keys = jax.random.split(key, 2 * len(widths))
        self.params = []
        cin = input_dim
        for i, cout in enumerate(widths):
            fan_in = 3 * 3 * cin
            w = jax.random.normal(keys[2 * i], (3, 3, cin, cout), jnp.float32)
            w = (w * (1.0 / fan_in) ** 0.5).astype(jnp.bfloat16)   # stored bf16
            b = 0.01 * jax.random.normal(keys[2 * i + 1], (cout,), jnp.float32)
            self.params.append((w, b))
            cin = cout

    def __call__(self, x_nchw):
        # NCHW in (PyTorch convention); NHWC + bf16 internally; NCHW f32 out.
        x = jnp.transpose(x_nchw, (0, 2, 3, 1))
        feats = OrderedDict()
        for lvl, (w, b) in enumerate(self.params):
            x = conv3x3_s2_relu(x, w, b)
            feats[str(lvl)] = jnp.transpose(x, (0, 3, 1, 2)).astype(jnp.float32)
        return feats


class Backbone:
    """JAX port of HGPose Backbone.forward semantics (used by GeoModel)."""

    def __init__(self, input_dim=3, model="simple_conv", key=None):
        self.model = SimpleConvBackbone(input_dim, key=key)

    def forward(self, query_views, input_views=None):
        bsz, n_que = query_views.shape[0:2]
        query_feat = OrderedDict()
        if input_views is not None:
            input_feat = OrderedDict()
            n_inp = input_views.shape[1]
            stack = jnp.concatenate([query_views, input_views], axis=1)
            stack = stack.reshape((-1,) + stack.shape[2:])          # flatten(0,1)
            f = self.model(stack)
            for level, feature in f.items():
                feature = feature.reshape(
                    (bsz, n_que + n_inp) + feature.shape[1:]        # unflatten
                )
                query_feat[level] = feature[:, :n_que]
                input_feat[level] = feature[:, n_que:]
            return query_feat, input_feat
        else:
            stack = query_views.reshape((-1,) + query_views.shape[2:])
            f = self.model(stack)
            for level, feature in f.items():
                feature = feature.reshape((bsz, n_que) + feature.shape[1:])
                query_feat[level] = feature[:, :n_que]
            return query_feat


if __name__ == "__main__":
    key = jax.random.PRNGKey(0)
    k_q, k_i, k_p = jax.random.split(key, 3)

    # Quick correctness check of the fused Pallas matmul vs plain jnp (bf16).
    a = jax.random.normal(jax.random.PRNGKey(1), (96, 27), jnp.float32)
    bm = jax.random.normal(jax.random.PRNGKey(2), (27, 8), jnp.float32) * 0.2
    bb = jax.random.normal(jax.random.PRNGKey(3), (8,), jnp.float32) * 0.1
    got = matmul_bias_relu(a, bm, bb, out_dtype=jnp.float32)
    ref = jnp.maximum(
        a.astype(jnp.bfloat16).astype(jnp.float32)
        @ bm.astype(jnp.bfloat16).astype(jnp.float32) + bb, 0.0)
    jax.block_until_ready(got)
    assert jnp.allclose(got, ref, atol=2e-2, rtol=2e-2), "matmul kernel mismatch"

    bsz, n_que, n_inp, C, H, W = 2, 2, 2, 3, 16, 16
    query_views = jax.random.normal(k_q, (bsz, n_que, C, H, W), jnp.float32)
    input_views = jax.random.normal(k_i, (bsz, n_inp, C, H, W), jnp.float32)

    backbone = Backbone(input_dim=C, key=k_p)

    # Path 1: query + input views.
    q_feat, i_feat = backbone.forward(query_views, input_views)
    for lvl in q_feat:
        jax.block_until_ready(q_feat[lvl])
        jax.block_until_ready(i_feat[lvl])
        assert q_feat[lvl].shape[:2] == (bsz, n_que)
        assert i_feat[lvl].shape[:2] == (bsz, n_inp)

    # Path 2: query views only.
    q_only = backbone.forward(query_views)
    for lvl in q_only:
        jax.block_until_ready(q_only[lvl])
        assert q_only[lvl].shape[:2] == (bsz, n_que)

    print("KERNEL_OK")
</pallas_src>

<mosaic_0001>
module attributes {stable_mosaic.version = 11 : i64} {
  func.func @_matmul_bias_relu_kernel(%arg0: i32, %arg1: i32, %arg2: memref<96x27xbf16, #tpu.memory_space<vmem>>, %arg3: memref<27x8xbf16, #tpu.memory_space<vmem>>, %arg4: memref<1x8xf32, #tpu.memory_space<vmem>>, %arg5: memref<96x8xf32, #tpu.memory_space<vmem>>) attributes {dimension_semantics = [#tpu.dimension_semantics<parallel>, #tpu.dimension_semantics<parallel>], iteration_bounds = array<i64: 1, 1>, scalar_prefetch = 0 : i64, scratch_operands = 0 : i64, tpu.core_type = #tpu.core_type<tc>, window_params = [{transform_indices = @transform_0, window_bounds = array<i64: 96, 27>}, {transform_indices = @transform_1, window_bounds = array<i64: 27, 8>}, {transform_indices = @transform_2, window_bounds = array<i64: 1, 8>}, {transform_indices = @transform_3, window_bounds = array<i64: 96, 8>}]} {
    %c0 = arith.constant 0 : index
    %c0_0 = arith.constant 0 : index
    %0 = vector.load %arg2[%c0, %c0_0] : memref<96x27xbf16, #tpu.memory_space<vmem>>, vector<96x27xbf16>
    %c0_1 = arith.constant 0 : index
    %c0_2 = arith.constant 0 : index
    %1 = vector.load %arg3[%c0_1, %c0_2] : memref<27x8xbf16, #tpu.memory_space<vmem>>, vector<27x8xbf16>
    %cst = arith.constant dense<0.000000e+00> : vector<96x8xf32>
    %2 = tpu.matmul %0, %1, %cst {dimension_numbers = #tpu.dot_dimension_numbers<[1], [0], [0], [1], [0, 0, 1, 1], [], []>} : vector<96x27xbf16>, vector<27x8xbf16>, vector<96x8xf32> -> vector<96x8xf32>
    %c0_3 = arith.constant 0 : index
    %c0_4 = arith.constant 0 : index
    %3 = vector.load %arg4[%c0_3, %c0_4] : memref<1x8xf32, #tpu.memory_space<vmem>>, vector<1x8xf32>
    %4 = vector.broadcast %3 : vector<1x8xf32> to vector<96x8xf32>
    %5 = arith.addf %2, %4 : vector<96x8xf32>
    %cst_5 = arith.constant 0.000000e+00 : f32
    %6 = vector.broadcast %cst_5 : f32 to vector<96x8xf32>
    %7 = arith.maximumf %5, %6 : vector<96x8xf32>
    %c0_6 = arith.constant 0 : index
    %c0_7 = arith.constant 0 : index
    %8 = vector.load %arg5[%c0_6, %c0_7] : memref<96x8xf32, #tpu.memory_space<vmem>>, vector<96x8xf32>
    tpu.vector_store %arg5[%c0_6, %c0_7], %7 {strides = array<i32>} : memref<96x8xf32, #tpu.memory_space<vmem>>, vector<96x8xf32>,
    return
  }
  func.func @transform_0(%arg0: i32, %arg1: i32) -> (i32, i32) {
    %c0_i32 = arith.constant 0 : i32
    %c0_i32_0 = arith.constant 0 : i32
    return %arg0, %c0_i32 : i32, i32
  }
  func.func @transform_1(%arg0: i32, %arg1: i32) -> (i32, i32) {
    %c0_i32 = arith.constant 0 : i32
    %c0_i32_0 = arith.constant 0 : i32
    return %c0_i32, %arg1 : i32, i32
  }
  func.func @transform_2(%arg0: i32, %arg1: i32) -> (i32, i32) {
    %c0_i32 = arith.constant 0 : i32
    %c0_i32_0 = arith.constant 0 : i32
    return %c0_i32, %arg1 : i32, i32
  }
  func.func @transform_3(%arg0: i32, %arg1: i32) -> (i32, i32) {
    %c0_i32 = arith.constant 0 : i32
    return %arg0, %arg1 : i32, i32
  }
}

</mosaic_0001>

<llo_original>
// kernel: tpu_custom_call.1
$region0: #{tpu_custom_call.1}
  #allocation0 [shape = 'u32[]', space=smem, size = 0x4, offset = 0x4, fixed_abs, tag = 'smem constant byte address 0x4 - core index']
  #allocation1 [shape = 'u32[72,128]{1,0:T(1,128)}', space=vmem, size = 0x9000, scoped, tag = 'internal scratch']
  %s0 = inlined_call_operand.vmem [shape: bf16[96,27], index: 0, kind: input, shape index: {}]
  %s1 = inlined_call_operand.vmem [shape: bf16[27,8], index: 1, kind: input, shape index: {}]
  %s2 = inlined_call_operand.vmem [shape: f32[1,8], index: 2, kind: input, shape index: {}]
  %s3 = inlined_call_operand.vmem [shape: f32[96,8], index: 3, kind: output, shape index: {}]
  %s4 = sld [smem:[#allocation0]]
  $region22: #{tpu_custom_call.1} parent=0
    _
  %s6 = ssub.s32 1, %s4
  %s7 = scalar_select 0, %s6, %s4
  // Predicated region
  $region2: #{tpu_custom_call.1} parent=0 // pred_check
    _
  $region3: #{tpu_custom_call.1} parent=0 // pred_check_branch
    %9 = sbr.rel (0) target = $region5
  $region4: #{tpu_custom_call.1} parent=0 // pred_region
    _
  $region5: #{tpu_custom_call.1} parent=0 // pred_fallthru
    _
  // Predicated region
  $region6: #{tpu_custom_call.1} parent=0 // pred_check
    _
  $region7: #{tpu_custom_call.1} parent=0 // pred_check_branch
    %11 = sbr.rel (0) target = $region9
  $region8: #{tpu_custom_call.1} parent=0 // pred_region
    _
  $region9: #{tpu_custom_call.1} parent=0 // pred_fallthru
    _
  // Predicated region
  $region10: #{tpu_custom_call.1} parent=0 // pred_check
    _
  $region11: #{tpu_custom_call.1} parent=0 // pred_check_branch
    %13 = sbr.rel (0) target = $region13
  $region12: #{tpu_custom_call.1} parent=0 // pred_region
    _
  $region13: #{tpu_custom_call.1} parent=0 // pred_fallthru
    _
  %v15 = vld [vmem:[%s0] sm:$0xf]
  %v16 = vld [vmem:[%s0 + $0x4] sm:$0xf]
  %v17 = vld [vmem:[%s0 + $0x8] sm:$0xf]
  %v18 = vld [vmem:[%s0 + $0xc] sm:$0xf]
  %v19 = vld [vmem:[%s0 + $0x10] sm:$0xf]
  %v20 = vld [vmem:[%s0 + $0x14] sm:$0xf]
  %v21 = vld [vmem:[%s0 + $0x18] sm:$0xf]
  %v22 = vld [vmem:[%s0 + $0x1c] sm:$0xf]
  %v23 = vld [vmem:[%s0 + $0x20] sm:$0xf]
  %v24 = vld [vmem:[%s0 + $0x24] sm:$0xf]
  %v25 = vld [vmem:[%s0 + $0x28] sm:$0xf]
  %v26 = vld [vmem:[%s0 + $0x2c] sm:$0xf]
  %v27 = vld [vmem:[%s1] sm:$0xf]
  %v28 = vld [vmem:[%s1 + $0x4] sm:$0xf]
  %v29 = vld [vmem:[%s1 + $0x8] sm:$0xf]
  %v30 = vld [vmem:[%s1 + $0xc] sm:$0x3]
  %v31 = vld [vmem:[%s2] sm:$0x1]
  %v33 = vperm.slane %v31, 0
  %v47 = vunpack.c.l.b16 %v15
  %v48 = vunpack.c.l.b16 %v16
  %v49 = vunpack.c.l.b16 %v17
  %v50 = vunpack.c.l.b16 %v18
  %v51 = vunpack.c.l.b16 %v19
  %v52 = vunpack.c.l.b16 %v20
  %v53 = vunpack.c.l.b16 %v21
  %v54 = vunpack.c.l.b16 %v22
  %v55 = vunpack.c.l.b16 %v23
  %v56 = vunpack.c.l.b16 %v24
  %v57 = vunpack.c.l.b16 %v25
  %v58 = vunpack.c.l.b16 %v26
  %v59 = vpack.c.b16 %v48, %v47
  %v60 = vpack.c.b16 %v50, %v49
  %v61 = vpack.c.b16 %v52, %v51
  %v62 = vpack.c.b16 %v54, %v53
  %v63 = vpack.c.b16 %v56, %v55
  %v64 = vpack.c.b16 %v58, %v57
  %v69 = vunpack.c.l.b16 %v27
  %v70 = vunpack.c.l.b16 %v28
  %v71 = vunpack.c.l.b16 %v29
  %v72 = vunpack.c.l.b16 %v30
  %v73 = vpack.c.b16 %v70, %v69
  %v74 = vpack.c.b16 %v72, %v71
  %vm76 = vcmask 220160
  %v78 = vsel %vm76, %v59, 0
  %v81 = vsel %vm76, %v60, 0
  %v84 = vsel %vm76, %v61, 0
  %v87 = vsel %vm76, %v62, 0
  %v90 = vsel %vm76, %v63, 0
  %v93 = vsel %vm76, %v64, 0
  %vm95 = vcmask 1044480
  %vm96 = vcmask 1045504
  %v97 = vsel %vm95, 4294967295, 65535
  %v98 = vsel %vm96, %v97, 0
  %v100 = vand.u32 %v74, %v98
  %102 = vmatpush.bf16.msra.mxu0 0
  %103 = vmatpush.bf16.msra.mxu0 0
  %104 = vmatpush.bf16.msra.mxu0 0
  %105 = vmatpush.bf16.msra.mxu0 0
  %106 = vmatpush.bf16.msra.mxu0 0
  %107 = vmatpush.bf16.msra.mxu0 0
  %108 = vmatpush.bf16.msra.mxu0 %v100
  %109 = vmatpush.bf16.msra.mxu0 %v73
  %110 = vmatmul.bf16.gmra.mxu0 %v78
  %v111 = vpop.f32.mrf.mxu0
  %v112 = vadd.f32 %v33, %v111
  %v113 = vpop.f32.mrf.mxu0
  %v114 = vadd.f32 %v33, %v113
  %115 = vmatmul.bf16.gmra.mxu0 %v81
  %v116 = vpop.f32.mrf.mxu0
  %v117 = vadd.f32 %v33, %v116
  %v118 = vpop.f32.mrf.mxu0
  %v119 = vadd.f32 %v33, %v118
  %120 = vmatmul.bf16.gmra.mxu0 %v84
  %v121 = vpop.f32.mrf.mxu0
  %v122 = vadd.f32 %v33, %v121
  %v123 = vpop.f32.mrf.mxu0
  %v124 = vadd.f32 %v33, %v123
  %125 = vmatmul.bf16.gmra.mxu0 %v87
  %v126 = vpop.f32.mrf.mxu0
  %v127 = vadd.f32 %v33, %v126
  %v128 = vpop.f32.mrf.mxu0
  %v129 = vadd.f32 %v33, %v128
  %130 = vmatmul.bf16.gmra.mxu0 %v90
  %v131 = vpop.f32.mrf.mxu0
  %v132 = vadd.f32 %v33, %v131
  %v133 = vpop.f32.mrf.mxu0
  %v134 = vadd.f32 %v33, %v133
  %135 = vmatmul.bf16.gmra.mxu0 %v93
  %v136 = vpop.f32.mrf.mxu0
  %v137 = vadd.f32 %v33, %v136
  %v138 = vpop.f32.mrf.mxu0
  %v139 = vadd.f32 %v33, %v138
  %140 = vdwg.mxu0
  %v141 = vmax.f32 %v112, 0.0
  %v142 = vmax.f32 %v114, 0.0
  %v143 = vmax.f32 %v117, 0.0
  %v144 = vmax.f32 %v119, 0.0
  %v145 = vmax.f32 %v122, 0.0
  %v146 = vmax.f32 %v124, 0.0
  %v147 = vmax.f32 %v127, 0.0
  %v148 = vmax.f32 %v129, 0.0
  %v149 = vmax.f32 %v132, 0.0
  %v150 = vmax.f32 %v134, 0.0
  %v151 = vmax.f32 %v137, 0.0
  %v152 = vmax.f32 %v139, 0.0
  %vm153 = vcmask 64512
  %154 = vst.msk [vmem:[%s3] sm:$0xff] %vm153, %v141
  %155 = vst.msk [vmem:[%s3 + $0x8] sm:$0xff] %vm153, %v142
  %156 = vst.msk [vmem:[%s3 + $0x10] sm:$0xff] %vm153, %v143
  %157 = vst.msk [vmem:[%s3 + $0x18] sm:$0xff] %vm153, %v144
  %158 = vst.msk [vmem:[%s3 + $0x20] sm:$0xff] %vm153, %v145
  %159 = vst.msk [vmem:[%s3 + $0x28] sm:$0xff] %vm153, %v146
  %160 = vst.msk [vmem:[%s3 + $0x30] sm:$0xff] %vm153, %v147
  %161 = vst.msk [vmem:[%s3 + $0x38] sm:$0xff] %vm153, %v148
  %162 = vst.msk [vmem:[%s3 + $0x40] sm:$0xff] %vm153, %v149
  %163 = vst.msk [vmem:[%s3 + $0x48] sm:$0xff] %vm153, %v150
  %164 = vst.msk [vmem:[%s3 + $0x50] sm:$0xff] %vm153, %v151
  %165 = vst.msk [vmem:[%s3 + $0x58] sm:$0xff] %vm153, %v152
  // Predicated region
  $region14: #{tpu_custom_call.1} parent=0 // pred_check
    _
  $region15: #{tpu_custom_call.1} parent=0 // pred_check_branch
    %167 = sbr.rel (0) target = $region17
  $region16: #{tpu_custom_call.1} parent=0 // pred_region
    _
  $region17: #{tpu_custom_call.1} parent=0 // pred_fallthru
    _
  // Predicated region
  $region18: #{tpu_custom_call.1} parent=0 // pred_check
    _
  $region19: #{tpu_custom_call.1} parent=0 // pred_check_branch
    %169 = sbr.rel (0) target = $region21
  $region20: #{tpu_custom_call.1} parent=0 // pred_region
    _
  $region21: #{tpu_custom_call.1} parent=0 // pred_fallthru
    _

</llo_original>
